<compile_context>
chip_gen: v7x
topology: tpu7x:2x2x1
jax: 0.10.0
libtpu: 0.0.40
codegen_flags: <defaults>
</compile_context>

<pallas_src>
import functools

import jax
import jax.numpy as jnp
from jax.experimental import pallas as pl
from jax.experimental.pallas import tpu as pltpu


def _gcn_kernel(seq_ref, wt_ref, adj_ref, bias_ref, alpha_ref, out_ref, acc_ref):
    # seq_ref : (1, tk, Fin)   block of input node features
    # wt_ref  : (Fin, Fout)    pre-transposed linear weight (resident)
    # adj_ref : (1, ti, tk)    adjacency block
    # bias_ref: (1, Fout)
    # alpha_ref: (1, 1)        PReLU slope
    # out_ref : (1, ti, Fout)  output block (resident across the k axis)
    # acc_ref : (ti, Fout)     f32 accumulator scratch
    k = pl.program_id(2)

    @pl.when(k == 0)
    def _():
        acc_ref[...] = jnp.zeros_like(acc_ref)

    # Linear transform of this neighbour tile: (tk, Fin) @ (Fin, Fout) -> (tk, Fout)
    h = jnp.dot(seq_ref[0], wt_ref[...], preferred_element_type=jnp.float32)
    # Aggregate: (ti, tk) @ (tk, Fout) -> (ti, Fout)
    acc_ref[...] += jnp.dot(adj_ref[0], h, preferred_element_type=jnp.float32)

    @pl.when(k == pl.num_programs(2) - 1)
    def _():
        y = acc_ref[...] + bias_ref[...]              # (ti,Fout) + (1,Fout)
        y = jnp.where(y > 0, y, alpha_ref[...] * y)   # PReLU (VPU, broadcast slope)
        out_ref[0] = y.astype(out_ref.dtype)


@functools.partial(jax.jit, static_argnames=("block_i", "block_k"))
def gcn_forward(seq, adj, weight, bias, prelu_alpha, *, block_i=None, block_k=None):
    """Fused GCN forward: PReLU(bmm(adj, seq @ weight.T) + bias).

    seq:    (B, N, Fin)
    adj:    (B, N, N)     dense adjacency (sparse path not supported)
    weight: (Fout, Fin)   nn.Linear weight layout
    bias:   (Fout,) or None
    prelu_alpha: scalar PReLU slope
    """
    B, N, Fin = seq.shape
    Fout, Fin2 = weight.shape
    assert Fin == Fin2, (Fin, Fin2)
    assert adj.shape == (B, N, N), adj.shape

    # Pre-transpose the weight outside the kernel (layout plumbing, no XLU work
    # inside the kernel) so the MXU sees (Fin, Fout) directly.
    wt = jnp.asarray(weight, jnp.float32).T                      # (Fin, Fout)
    if bias is None:
        bias = jnp.zeros((Fout,), jnp.float32)
    bias2d = jnp.asarray(bias, jnp.float32).reshape(1, Fout)     # (1, Fout)
    alpha2d = jnp.asarray(prelu_alpha, jnp.float32).reshape(1, 1)

    # Node-tile sizes: 128 (lane-dense, (8,128)-aligned) when divisible,
    # otherwise fall back to the full extent (full-dim blocks are always legal).
    def _pick(n, t):
        return t if n % t == 0 else n
    ti = block_i or _pick(N, 128)
    tk = block_k or _pick(N, 128)

    grid = (B, N // ti, N // tk)

    return pl.pallas_call(
        _gcn_kernel,
        out_shape=jax.ShapeDtypeStruct((B, N, Fout), seq.dtype),
        grid_spec=pltpu.PrefetchScalarGridSpec(
            num_scalar_prefetch=0,
            grid=grid,
            in_specs=[
                pl.BlockSpec((1, tk, Fin), lambda b, i, k: (b, k, 0)),   # seq
                pl.BlockSpec((Fin, Fout), lambda b, i, k: (0, 0)),       # W^T
                pl.BlockSpec((1, ti, tk), lambda b, i, k: (b, i, k)),    # adj
                pl.BlockSpec((1, Fout), lambda b, i, k: (0, 0)),         # bias
                pl.BlockSpec((1, 1), lambda b, i, k: (0, 0)),            # alpha
            ],
            out_specs=pl.BlockSpec((1, ti, Fout), lambda b, i, k: (b, i, 0)),
            scratch_shapes=[pltpu.VMEM((ti, Fout), jnp.float32)],
        ),
        compiler_params=pltpu.CompilerParams(
            dimension_semantics=("parallel", "parallel", "arbitrary"),
            vmem_limit_bytes=32 * 1024 * 1024,
        ),
    )(seq, wt, adj, bias2d, alpha2d)


# TODO(synk): the sparse=True path (torch.spmm on a sparse adjacency) has no
# clean Pallas equivalent here; only the dense bmm path is implemented.


if __name__ == "__main__":
    key = jax.random.PRNGKey(0)
    k_seq, k_adj, k_w, k_b = jax.random.split(key, 4)

    # Small GCN-shaped problem: batch=2, N=128 nodes, in_ft=32, out_ft=128.
    B, N, Fin, Fout = 2, 128, 32, 128
    seq = jax.random.normal(k_seq, (B, N, Fin), dtype=jnp.float32)
    adj = jax.random.normal(k_adj, (B, N, N), dtype=jnp.float32) / jnp.sqrt(N)
    weight = jax.random.normal(k_w, (Fout, Fin), dtype=jnp.float32) / jnp.sqrt(Fin)
    bias = jax.random.normal(k_b, (Fout,), dtype=jnp.float32) * 0.1
    alpha = 0.25  # nn.PReLU() default slope

    out = gcn_forward(seq, adj, weight, bias, alpha)
    out = jax.block_until_ready(out)

    # Plain-JAX reference of the PyTorch forward (dense path).
    h_ref = jnp.einsum("bnf,of->bno", seq, weight)
    ref = jnp.einsum("bmn,bno->bmo", adj, h_ref) + bias
    ref = jnp.where(ref > 0, ref, alpha * ref)

    assert out.shape == (B, N, Fout), out.shape
    assert jnp.allclose(out, ref, atol=1e-4, rtol=1e-4), (
        float(jnp.max(jnp.abs(out - ref)))
    )

    print("KERNEL_OK")
</pallas_src>

<mosaic_0001>
module attributes {stable_mosaic.version = 11 : i64} {
  func.func @_gcn_kernel(%arg0: i32, %arg1: i32, %arg2: i32, %arg3: memref<1x128x32xf32, #tpu.memory_space<vmem>>, %arg4: memref<32x128xf32, #tpu.memory_space<vmem>>, %arg5: memref<1x128x128xf32, #tpu.memory_space<vmem>>, %arg6: memref<1x128xf32, #tpu.memory_space<vmem>>, %arg7: memref<1x1xf32, #tpu.memory_space<vmem>>, %arg8: memref<1x128x128xf32, #tpu.memory_space<vmem>>, %arg9: memref<128x128xf32, #tpu.memory_space<vmem>>) attributes {dimension_semantics = [#tpu.dimension_semantics<parallel>, #tpu.dimension_semantics<parallel>, #tpu.dimension_semantics<arbitrary>], iteration_bounds = array<i64: 2, 1, 1>, scalar_prefetch = 0 : i64, scratch_operands = 1 : i64, tpu.core_type = #tpu.core_type<tc>, window_params = [{transform_indices = @transform_0, window_bounds = array<i64: 1, 128, 32>}, {pipeline_mode = #tpu.pipeline_mode<synchronous>, transform_indices = @transform_1, window_bounds = array<i64: 32, 128>}, {transform_indices = @transform_2, window_bounds = array<i64: 1, 128, 128>}, {pipeline_mode = #tpu.pipeline_mode<synchronous>, transform_indices = @transform_3, window_bounds = array<i64: 1, 128>}, {pipeline_mode = #tpu.pipeline_mode<synchronous>, transform_indices = @transform_4, window_bounds = array<i64: 1, 1>}, {transform_indices = @transform_5, window_bounds = array<i64: 1, 128, 128>}]} {
    %c0_i32 = arith.constant 0 : i32
    %0 = arith.cmpi eq, %arg2, %c0_i32 : i32
    %1 = arith.extui %0 : i1 to i32
    %c0_i32_0 = arith.constant 0 : i32
    %2 = arith.cmpi ne, %1, %c0_i32_0 : i32
    scf.if %2 {
      %cst_15 = arith.constant 0.000000e+00 : f32
      %16 = vector.broadcast %cst_15 : f32 to vector<128x128xf32>
      %c0_16 = arith.constant 0 : index
      %c0_17 = arith.constant 0 : index
      %17 = vector.load %arg9[%c0_16, %c0_17] : memref<128x128xf32, #tpu.memory_space<vmem>>, vector<128x128xf32>
      tpu.vector_store %arg9[%c0_16, %c0_17], %16 {strides = array<i32>} : memref<128x128xf32, #tpu.memory_space<vmem>>, vector<128x128xf32>,
    } else {
    }
    %c0 = arith.constant 0 : index
    %c0_1 = arith.constant 0 : index
    %c0_2 = arith.constant 0 : index
    %3 = vector.load %arg3[%c0, %c0_1, %c0_2] : memref<1x128x32xf32, #tpu.memory_space<vmem>>, vector<1x128x32xf32>
    %4 = vector.shape_cast %3 : vector<1x128x32xf32> to vector<128x32xf32>
    %c0_3 = arith.constant 0 : index
    %c0_4 = arith.constant 0 : index
    %5 = vector.load %arg4[%c0_3, %c0_4] : memref<32x128xf32, #tpu.memory_space<vmem>>, vector<32x128xf32>
    %cst = arith.constant dense<0.000000e+00> : vector<128x128xf32>
    %6 = tpu.matmul %4, %5, %cst {dimension_numbers = #tpu.dot_dimension_numbers<[1], [0], [0], [1], [0, 0, 1, 1], [], []>} : vector<128x32xf32>, vector<32x128xf32>, vector<128x128xf32> -> vector<128x128xf32>
    %c0_5 = arith.constant 0 : index
    %c0_6 = arith.constant 0 : index
    %7 = vector.load %arg9[%c0_5, %c0_6] : memref<128x128xf32, #tpu.memory_space<vmem>>, vector<128x128xf32>
    %c0_7 = arith.constant 0 : index
    %c0_8 = arith.constant 0 : index
    %c0_9 = arith.constant 0 : index
    %8 = vector.load %arg5[%c0_7, %c0_8, %c0_9] : memref<1x128x128xf32, #tpu.memory_space<vmem>>, vector<1x128x128xf32>
    %9 = vector.shape_cast %8 : vector<1x128x128xf32> to vector<128x128xf32>
    %cst_10 = arith.constant dense<0.000000e+00> : vector<128x128xf32>
    %10 = tpu.matmul %9, %6, %cst_10 {dimension_numbers = #tpu.dot_dimension_numbers<[1], [0], [0], [1], [0, 0, 1, 1], [], []>} : vector<128x128xf32>, vector<128x128xf32>, vector<128x128xf32> -> vector<128x128xf32>
    %11 = arith.addf %7, %10 : vector<128x128xf32>
    %c0_11 = arith.constant 0 : index
    %c0_12 = arith.constant 0 : index
    %12 = vector.load %arg9[%c0_11, %c0_12] : memref<128x128xf32, #tpu.memory_space<vmem>>, vector<128x128xf32>
    tpu.vector_store %arg9[%c0_11, %c0_12], %11 {strides = array<i32>} : memref<128x128xf32, #tpu.memory_space<vmem>>, vector<128x128xf32>,
    %c0_i32_13 = arith.constant 0 : i32
    %13 = arith.cmpi eq, %arg2, %c0_i32_13 : i32
    %14 = arith.extui %13 : i1 to i32
    %c0_i32_14 = arith.constant 0 : i32
    %15 = arith.cmpi ne, %14, %c0_i32_14 : i32
    scf.if %15 {
      %c0_15 = arith.constant 0 : index
      %c0_16 = arith.constant 0 : index
      %16 = vector.load %arg9[%c0_15, %c0_16] : memref<128x128xf32, #tpu.memory_space<vmem>>, vector<128x128xf32>
      %c0_17 = arith.constant 0 : index
      %c0_18 = arith.constant 0 : index
      %17 = vector.load %arg6[%c0_17, %c0_18] : memref<1x128xf32, #tpu.memory_space<vmem>>, vector<1x128xf32>
      %18 = vector.broadcast %17 : vector<1x128xf32> to vector<128x128xf32>
      %19 = arith.addf %16, %18 : vector<128x128xf32>
      %cst_19 = arith.constant 0.000000e+00 : f32
      %20 = vector.broadcast %cst_19 : f32 to vector<128x128xf32>
      %21 = arith.cmpf ogt, %19, %20 : vector<128x128xf32>
      %c0_20 = arith.constant 0 : index
      %c0_21 = arith.constant 0 : index
      %22 = vector.load %arg7[%c0_20, %c0_21] : memref<1x1xf32, #tpu.memory_space<vmem>>, vector<1x1xf32>
      %23 = vector.broadcast %22 : vector<1x1xf32> to vector<128x128xf32>
      %24 = arith.mulf %23, %19 : vector<128x128xf32>
      %25 = arith.select %21, %19, %24 : vector<128x128xi1>, vector<128x128xf32>
      %c0_22 = arith.constant 0 : index
      %c0_23 = arith.constant 0 : index
      %c0_24 = arith.constant 0 : index
      %26 = vector.load %arg8[%c0_22, %c0_23, %c0_24] : memref<1x128x128xf32, #tpu.memory_space<vmem>>, vector<1x128x128xf32>
      %27 = vector.shape_cast %26 : vector<1x128x128xf32> to vector<128x128xf32>
      %28 = vector.shape_cast %25 : vector<128x128xf32> to vector<1x128x128xf32>
      tpu.vector_store %arg8[%c0_22, %c0_23, %c0_24], %28 {strides = array<i32>} : memref<1x128x128xf32, #tpu.memory_space<vmem>>, vector<1x128x128xf32>,
    } else {
    }
    return
  }
  func.func @transform_0(%arg0: i32, %arg1: i32, %arg2: i32) -> (i32, i32, i32) {
    %c0_i32 = arith.constant 0 : i32
    %c0_i32_0 = arith.constant 0 : i32
    return %arg0, %arg2, %c0_i32 : i32, i32, i32
  }
  func.func @transform_1(%arg0: i32, %arg1: i32, %arg2: i32) -> (i32, i32) {
    %c0_i32 = arith.constant 0 : i32
    %c0_i32_0 = arith.constant 0 : i32
    %c0_i32_1 = arith.constant 0 : i32
    return %c0_i32, %c0_i32_0 : i32, i32
  }
  func.func @transform_2(%arg0: i32, %arg1: i32, %arg2: i32) -> (i32, i32, i32) {
    %c0_i32 = arith.constant 0 : i32
    return %arg0, %arg1, %arg2 : i32, i32, i32
  }
  func.func @transform_3(%arg0: i32, %arg1: i32, %arg2: i32) -> (i32, i32) {
    %c0_i32 = arith.constant 0 : i32
    %c0_i32_0 = arith.constant 0 : i32
    %c0_i32_1 = arith.constant 0 : i32
    return %c0_i32, %c0_i32_0 : i32, i32
  }
  func.func @transform_4(%arg0: i32, %arg1: i32, %arg2: i32) -> (i32, i32) {
    %c0_i32 = arith.constant 0 : i32
    %c0_i32_0 = arith.constant 0 : i32
    %c0_i32_1 = arith.constant 0 : i32
    return %c0_i32, %c0_i32_0 : i32, i32
  }
  func.func @transform_5(%arg0: i32, %arg1: i32, %arg2: i32) -> (i32, i32, i32) {
    %c0_i32 = arith.constant 0 : i32
    %c0_i32_0 = arith.constant 0 : i32
    return %arg0, %arg1, %c0_i32 : i32, i32, i32
  }
}

</mosaic_0001>

<llo_original>
// kernel: gcn_forward.1
$region0: #{gcn_forward.1}
  #allocation0 [shape = 'u32[]', space=smem, size = 0x4, offset = 0x4, fixed_abs, tag = 'smem constant byte address 0x4 - core index']
  #allocation1 [shape = 'u32[144,128]{1,0:T(1,128)}', space=vmem, size = 0x12000, scoped, tag = 'internal scratch']
  #allocation2 [shape = 'f32[128,128]{1,0:T(8,128)}', space=vmem, size = 0x10000, scoped, tag = 'scratch operand']
  #allocation3 [shape = 'f32[1,1]{1,0:T(1,128)S(1)}', space=vmem, size = 0x200, scoped, tag = 'scoped memory for gcn_forward.1']
  %s0 = inlined_call_operand.vmem [shape: f32[2,128,32], index: 0, kind: input, shape index: {}]
  %s1 = inlined_call_operand.vmem [shape: f32[32,128], index: 1, kind: input, shape index: {}]
  %s2 = inlined_call_operand.vmem [shape: f32[2,128,128], index: 2, kind: input, shape index: {}]
  %s3 = inlined_call_operand.vmem [shape: f32[1,128], index: 3, kind: input, shape index: {}]
  %s4 = inlined_call_operand.<no memory space> [shape: f32[1,1], index: 4, kind: input, shape index: {}]
  %s5 = inlined_call_operand.hbm [shape: f32[2,128,128], index: 5, kind: output, shape index: {}]
  %s6 = sld [smem:[#allocation0]]
  $region61: #{gcn_forward.1} parent=0
    _
  %s8 = ssub.s32 1, %s6
  %s9 = scalar_select 0, %s8, %s6
  %v10 = vstv %s4
  %11 = vst [vmem:[#allocation3] sm:$0x1] %v10
  $region1: #{gcn_forward.1} parent=0
    #allocation4 [shape = 'u8[131072]{0}', space=vmem, size = 0x20000, scoped, tag = 'output window, operand 0']
    #allocation5 [shape = 's32[2]{0}', space=sflag, size = 0x8, scoped, tag = 'scoped memory for gcn_forward.1']
    %12 = vsyncpa [#allocation5], 0
    %s13 = scalar_lea.sflag [#allocation5], 1
    %14 = vsyncpa %s13, 0
    loop: start=0, step=1, limit=4
    $region2: #{gcn_forward.1} parent=1 // loop_pre_header
      _
    $region3: #{gcn_forward.1} parent=1 // loop_header
      %s16 = sphi 0, %s20
      %p17 = scmp.ge.s32.totalorder %s16, 4
      %s23 = sphi 0, %s42
      %s24 = sphi 0, %s38
      %s25 = sphi 0, %s34
      %s26 = sphi 0, %s23
      %s27 = sphi 0, %s24
      %s28 = sphi 0, %s25
      %s29 = sphi 0, %s26
      %s30 = sphi 0, %s27
      %s31 = sphi 0, %s28
      %s47 = sphi 0, %s49
      %s50 = sphi 0, %s47
      %s51 = sphi 0, %s50
      %s67 = sphi 0, %s51
      %s71 = sphi 0, %s71
      %s73 = sphi 0, %s71
      %s74 = sphi 0, %s73
      %s88 = sphi 0, %s74
      %s98 = sphi 0, %s100
      %s101 = sphi 0, %s98
      %s102 = sphi 0, %s101
      %s118 = sphi 0, %s102
      %s122 = sphi 0, %s122
      %s124 = sphi 0, %s122
      %s125 = sphi 0, %s124
      %s139 = sphi 0, %s125
      %s143 = sphi 0, %s143
      %s145 = sphi 0, %s143
      %s146 = sphi 0, %s145
      %s160 = sphi 0, %s146
      %s168 = sphi 0, %s170
      %s171 = sphi 0, %s168
      %s172 = sphi 0, %s171
      %s188 = sphi 0, %s172
    $region4: #{gcn_forward.1} parent=1 // loop_header_branch
      %19 = sbr.rel (%p17) target = $region8
    $region5: #{gcn_forward.1} parent=1 // loop_body
      %s21 = ssub.s32 %s16, 1
      %s22 = ssub.s32 %s16, 2
      %s32 = sadd.s32 1, %s25
      %p33 = scmp.ge.s32.totalorder %s32, 1
      %s34 = scalar_select %p33, 0, %s32
      %s35 = sadd.s32 1, %s24
      %s36 = scalar_select %p33, %s35, %s24
      %p37 = scmp.ge.s32.totalorder %s36, 1
      %s38 = scalar_select %p37, 0, %s36
      %s39 = sadd.s32 1, %s23
      %s40 = scalar_select %p37, %s39, %s23
      %p41 = scmp.ge.s32.totalorder %s40, 2
      %s42 = scalar_select %p41, 0, %s40
      %s43 = ssub.s32 %s23, %s42
      %s44 = ssub.s32 %s25, %s34
      %s45 = sor.u32 %s43, %s44
      %p46 = scmp.eq.s32.totalorder %s45, 0
      %s48 = sadd.s32 %s47, 1
      %s49 = scalar_select %p46, %s47, %s48
      %p52 = pneg %p46
      %p53 = scmp.eq.s32.totalorder %s16, 1
      %p54 = por %p52, %p53
      %p55 = scmp.ne.s32.totalorder %s47, %s50
      %p56 = scmp.eq.s32.totalorder %s16, 0
      %p57 = por %p55, %p56
      %p58 = scmp.ne.s32.totalorder %s47, %s50
      %p59 = scmp.eq.s32.totalorder %s21, 1
      %p60 = por %p58, %p59
      %p61 = scmp.ne.s32.totalorder %s50, %s51
      %p62 = scmp.eq.s32.totalorder %s21, 0
      %p63 = por %p61, %p62
      %p64 = scmp.ne.s32.totalorder %s50, %s51
      %p65 = scmp.eq.s32.totalorder %s22, 1
      %p66 = por %p64, %p65
      %p68 = scmp.ne.s32.totalorder %s51, %s67
      %p69 = scmp.eq.s32.totalorder %s22, 0
      %p70 = por %p68, %p69
      %s72 = sadd.s32 %s71, 1
      %p75 = scmp.eq.s32.totalorder %s16, 1
      %p76 = scmp.ne.s32.totalorder %s71, %s73
      %p77 = scmp.eq.s32.totalorder %s16, 0
      %p78 = por %p76, %p77
      %p79 = scmp.ne.s32.totalorder %s71, %s73
      %p80 = scmp.eq.s32.totalorder %s21, 1
      %p81 = por %p79, %p80
      %p82 = scmp.ne.s32.totalorder %s73, %s74
      %p83 = scmp.eq.s32.totalorder %s21, 0
      %p84 = por %p82, %p83
      %p85 = scmp.ne.s32.totalorder %s73, %s74
      %p86 = scmp.eq.s32.totalorder %s22, 1
      %p87 = por %p85, %p86
      %p89 = scmp.ne.s32.totalorder %s74, %s88
      %p90 = scmp.eq.s32.totalorder %s22, 0
      %p91 = por %p89, %p90
      %s92 = ssub.s32 %s23, %s42
      %s93 = ssub.s32 %s24, %s38
      %s94 = sor.u32 %s92, %s93
      %s95 = ssub.s32 %s25, %s34
      %s96 = sor.u32 %s94, %s95
      %p97 = scmp.eq.s32.totalorder %s96, 0
      %s99 = sadd.s32 %s98, 1
      %s100 = scalar_select %p97, %s98, %s99
      %p103 = pneg %p97
      %p104 = scmp.eq.s32.totalorder %s16, 1
      %p105 = por %p103, %p104
      %p106 = scmp.ne.s32.totalorder %s98, %s101
      %p107 = scmp.eq.s32.totalorder %s16, 0
      %p108 = por %p106, %p107
      %p109 = scmp.ne.s32.totalorder %s98, %s101
      %p110 = scmp.eq.s32.totalorder %s21, 1
      %p111 = por %p109, %p110
      %p112 = scmp.ne.s32.totalorder %s101, %s102
      %p113 = scmp.eq.s32.totalorder %s21, 0
      %p114 = por %p112, %p113
      %p115 = scmp.ne.s32.totalorder %s101, %s102
      %p116 = scmp.eq.s32.totalorder %s22, 1
      %p117 = por %p115, %p116
      %p119 = scmp.ne.s32.totalorder %s102, %s118
      %p120 = scmp.eq.s32.totalorder %s22, 0
      %p121 = por %p119, %p120
      %s123 = sadd.s32 %s122, 1
      %p126 = scmp.eq.s32.totalorder %s16, 1
      %p127 = scmp.ne.s32.totalorder %s122, %s124
      %p128 = scmp.eq.s32.totalorder %s16, 0
      %p129 = por %p127, %p128
      %p130 = scmp.ne.s32.totalorder %s122, %s124
      %p131 = scmp.eq.s32.totalorder %s21, 1
      %p132 = por %p130, %p131
      %p133 = scmp.ne.s32.totalorder %s124, %s125
      %p134 = scmp.eq.s32.totalorder %s21, 0
      %p135 = por %p133, %p134
      %p136 = scmp.ne.s32.totalorder %s124, %s125
      %p137 = scmp.eq.s32.totalorder %s22, 1
      %p138 = por %p136, %p137
      %p140 = scmp.ne.s32.totalorder %s125, %s139
      %p141 = scmp.eq.s32.totalorder %s22, 0
      %p142 = por %p140, %p141
      %s144 = sadd.s32 %s143, 1
      %p147 = scmp.eq.s32.totalorder %s16, 1
      %p148 = scmp.ne.s32.totalorder %s143, %s145
      %p149 = scmp.eq.s32.totalorder %s16, 0
      %p150 = por %p148, %p149
      %p151 = scmp.ne.s32.totalorder %s143, %s145
      %p152 = scmp.eq.s32.totalorder %s21, 1
      %p153 = por %p151, %p152
      %p154 = scmp.ne.s32.totalorder %s145, %s146
      %p155 = scmp.eq.s32.totalorder %s21, 0
      %p156 = por %p154, %p155
      %p157 = scmp.ne.s32.totalorder %s145, %s146
      %p158 = scmp.eq.s32.totalorder %s22, 1
      %p159 = por %p157, %p158
      %p161 = scmp.ne.s32.totalorder %s146, %s160
      %p162 = scmp.eq.s32.totalorder %s22, 0
      %p163 = por %p161, %p162
      %s164 = ssub.s32 %s23, %s42
      %s165 = ssub.s32 %s24, %s38
      %s166 = sor.u32 %s164, %s165
      %p167 = scmp.eq.s32.totalorder %s166, 0
      %s169 = sadd.s32 %s168, 1
      %s170 = scalar_select %p167, %s168, %s169
      %p173 = pneg %p167
      %p174 = scmp.eq.s32.totalorder %s16, 1
      %p175 = por %p173, %p174
      %p176 = scmp.ne.s32.totalorder %s168, %s171
      %p177 = scmp.eq.s32.totalorder %s16, 0
      %p178 = por %p176, %p177
      %p179 = scmp.ne.s32.totalorder %s168, %s171
      %p180 = scmp.eq.s32.totalorder %s21, 1
      %p181 = por %p179, %p180
      %p182 = scmp.ne.s32.totalorder %s171, %s172
      %p183 = scmp.eq.s32.totalorder %s21, 0
      %p184 = por %p182, %p183
      %p185 = scmp.ne.s32.totalorder %s171, %s172
      %p186 = scmp.eq.s32.totalorder %s22, 1
      %p187 = por %p185, %p186
      %p189 = scmp.ne.s32.totalorder %s172, %s188
      %p190 = scmp.eq.s32.totalorder %s22, 0
      %p191 = por %p189, %p190
      %p192 = scmp.le.s32.totalorder 1, %s16
      %p193 = scmp.lt.s32.totalorder %s16, 3
      %p194 = pnand %p192, %p193
      %p195 = pneg %p194
      // Predicated region
      $region9: #{gcn_forward.1} parent=5 // pred_check
        _
      $region10: #{gcn_forward.1} parent=5 // pred_check_branch
        %197 = sbr.rel (%p194) target = $region12
      $region11: #{gcn_forward.1} parent=5 // pred_region
        %s198 = ssub.s32 %s16, 1
        // Predicated region
        $region13: #{gcn_forward.1} parent=11 // pred_check
          %p199 = pneg %p84
        $region14: #{gcn_forward.1} parent=11 // pred_check_branch
          %201 = sbr.rel (%p199) target = $region16
        $region15: #{gcn_forward.1} parent=11 // pred_region
          _
        $region16: #{gcn_forward.1} parent=11 // pred_fallthru
          _
        // Predicated region
        $region17: #{gcn_forward.1} parent=11 // pred_check
          %p202 = pneg %p135
        $region18: #{gcn_forward.1} parent=11 // pred_check_branch
          %204 = sbr.rel (%p202) target = $region20
        $region19: #{gcn_forward.1} parent=11 // pred_region
          _
        $region20: #{gcn_forward.1} parent=11 // pred_fallthru
          _
        // Predicated region
        $region21: #{gcn_forward.1} parent=11 // pred_check
          %p205 = pneg %p156
        $region22: #{gcn_forward.1} parent=11 // pred_check_branch
          %207 = sbr.rel (%p205) target = $region24
        $region23: #{gcn_forward.1} parent=11 // pred_region
          _
        $region24: #{gcn_forward.1} parent=11 // pred_fallthru
          _
      $region12: #{gcn_forward.1} parent=5 // pred_fallthru
        _
      %p208 = scmp.lt.s32.totalorder %s16, 2
      // Predicated region
      $region25: #{gcn_forward.1} parent=5 // pred_check
        %p209 = pneg %p208
      $region26: #{gcn_forward.1} parent=5 // pred_check_branch
        %211 = sbr.rel (%p209) target = $region28
      $region27: #{gcn_forward.1} parent=5 // pred_region
        // Predicated region
        $region29: #{gcn_forward.1} parent=27 // pred_check
          %p212 = pneg %p57
        $region30: #{gcn_forward.1} parent=27 // pred_check_branch
          %214 = sbr.rel (%p212) target = $region32
        $region31: #{gcn_forward.1} parent=27 // pred_region
          %s215 = smul.u32 16, %s25
          %p216 = scmp.lt.s32.totalorder %s23, 1
          %s217 = scalar_select %p216, %s23, 1
          %p218 = scmp.lt.s32.totalorder %s215, 15
          %s219 = scalar_select %p218, %s215, 15
          %s220 = smul.addr %s217, 16
          %s221 = sadd.s32 %s219, %s220
          %s222 = smul.addr %s221, 8
          %s223 = scalar_lea.vmem %s0, %s222
          %s224 = smul.u32 16, %s25
        $region32: #{gcn_forward.1} parent=27 // pred_fallthru
          _
        // Predicated region
        $region33: #{gcn_forward.1} parent=27 // pred_check
          %p225 = pneg %p108
        $region34: #{gcn_forward.1} parent=27 // pred_check_branch
          %227 = sbr.rel (%p225) target = $region36
        $region35: #{gcn_forward.1} parent=27 // pred_region
          %s228 = smul.u32 16, %s24
          %p229 = scmp.lt.s32.totalorder %s23, 1
          %s230 = scalar_select %p229, %s23, 1
          %p231 = scmp.lt.s32.totalorder %s228, 15
          %s232 = scalar_select %p231, %s228, 15
          %p233 = scmp.lt.s32.totalorder %s25, 0
          %s234 = scalar_select %p233, %s25, 0
          %s235 = sadd.s32 %s234, %s232
          %s236 = smul.addr %s230, 16
          %s237 = sadd.s32 %s235, %s236
          %s238 = smul.addr %s237, 8
          %s239 = scalar_lea.vmem %s2, %s238
          %s240 = smul.u32 16, %s24
        $region36: #{gcn_forward.1} parent=27 // pred_fallthru
          _
      $region28: #{gcn_forward.1} parent=5 // pred_fallthru
        _
      %p241 = scmp.le.s32.totalorder 1, %s16
      %p242 = scmp.lt.s32.totalorder %s16, 3
      %p243 = pnand %p241, %p242
      %p244 = pneg %p243
      // Predicated region
      $region37: #{gcn_forward.1} parent=5 // pred_check
        _
      $region38: #{gcn_forward.1} parent=5 // pred_check_branch
        %246 = sbr.rel (%p243) target = $region40
      $region39: #{gcn_forward.1} parent=5 // pred_region
        %s247 = ssub.s32 %s16, 1
        %s248 = smul.u32 16, %s28
        %p249 = scmp.lt.s32.totalorder %s26, 1
        %s250 = scalar_select %p249, %s26, 1
        %p251 = scmp.lt.s32.totalorder %s248, 15
        %s252 = scalar_select %p251, %s248, 15
        %s253 = smul.addr %s250, 16
        %s254 = sadd.s32 %s252, %s253
        %s255 = smul.addr %s254, 8
        %s256 = scalar_lea.vmem %s0, %s255
        %p257 = pneg %p63
        %p258 = pneg %p60
        %p259 = pneg %p84
        %p260 = pneg %p81
        %s261 = smul.u32 16, %s27
        %p262 = scmp.lt.s32.totalorder %s26, 1
        %s263 = scalar_select %p262, %s26, 1
        %p264 = scmp.lt.s32.totalorder %s261, 15
        %s265 = scalar_select %p264, %s261, 15
        %p266 = scmp.lt.s32.totalorder %s28, 0
        %s267 = scalar_select %p266, %s28, 0
        %s268 = sadd.s32 %s267, %s265
        %s269 = smul.addr %s263, 16
        %s270 = sadd.s32 %s268, %s269
        %s271 = smul.addr %s270, 8
        %s272 = scalar_lea.vmem %s2, %s271
        %p273 = pneg %p114
        %p274 = pneg %p111
        %p275 = pneg %p135
        %p276 = pneg %p132
        %p277 = pneg %p156
        %p278 = pneg %p153
        %p279 = pneg %p184
        %p280 = pneg %p181
        %s281 = sand.u32 %s171, 1
        %s282 = scalar_lea.sflag [#allocation5], %s281
        %s283 = sand.u32 %s171, 1
        %s284 = smul.addr %s283, 128
        %s285 = scalar_lea.vmem [#allocation4], %s284
        %s286 = smul.u32 16, %s28
        %p287 = scmp.lt.s32.totalorder %s26, 1
        %s288 = scalar_select %p287, %s26, 1
        %p289 = scmp.lt.s32.totalorder %s286, 15
        %s290 = scalar_select %p289, %s286, 15
        %s291 = smul.addr %s288, 16
        %s292 = sadd.s32 %s290, %s291
        %s293 = smul.addr %s292, 8
        %s294 = scalar_lea.vmem %s0, %s293
        %s295 = smul.u32 16, %s28
        %s296 = smul.u32 16, %s27
        %p297 = scmp.lt.s32.totalorder %s26, 1
        %s298 = scalar_select %p297, %s26, 1
        %p299 = scmp.lt.s32.totalorder %s296, 15
        %s300 = scalar_select %p299, %s296, 15
        %p301 = scmp.lt.s32.totalorder %s28, 0
        %s302 = scalar_select %p301, %s28, 0
        %s303 = sadd.s32 %s302, %s300
        %s304 = smul.addr %s298, 16
        %s305 = sadd.s32 %s303, %s304
        %s306 = smul.addr %s305, 8
        %s307 = scalar_lea.vmem %s2, %s306
        %s308 = smul.u32 16, %s27
        %s309 = smul.u32 16, %s27
        %p310 = scmp.eq.s32.totalorder %s28, 0
        // Predicated region
        $region41: #{gcn_forward.1} parent=39 // pred_check
          %p311 = pneg %p310
        $region42: #{gcn_forward.1} parent=39 // pred_check_branch
          %313 = sbr.rel (%p311) target = $region44
        $region43: #{gcn_forward.1} parent=39 // pred_region
          %314 = vst [vmem:[#allocation2] sm:$0xff] 0.0
          %315 = vst [vmem:[#allocation2 + $0x8] sm:$0xff] 0.0
          %316 = vst [vmem:[#allocation2 + $0x10] sm:$0xff] 0.0
          %317 = vst [vmem:[#allocation2 + $0x18] sm:$0xff] 0.0
          %318 = vst [vmem:[#allocation2 + $0x20] sm:$0xff] 0.0
          %319 = vst [vmem:[#allocation2 + $0x28] sm:$0xff] 0.0
          %320 = vst [vmem:[#allocation2 + $0x30] sm:$0xff] 0.0
          %321 = vst [vmem:[#allocation2 + $0x38] sm:$0xff] 0.0
          %322 = vst [vmem:[#allocation2 + $0x40] sm:$0xff] 0.0
          %323 = vst [vmem:[#allocation2 + $0x48] sm:$0xff] 0.0
          %324 = vst [vmem:[#allocation2 + $0x50] sm:$0xff] 0.0
          %325 = vst [vmem:[#allocation2 + $0x58] sm:$0xff] 0.0
          %326 = vst [vmem:[#allocation2 + $0x60] sm:$0xff] 0.0
          %327 = vst [vmem:[#allocation2 + $0x68] sm:$0xff] 0.0
          %328 = vst [vmem:[#allocation2 + $0x70] sm:$0xff] 0.0
          %329 = vst [vmem:[#allocation2 + $0x78] sm:$0xff] 0.0
        $region44: #{gcn_forward.1} parent=39 // pred_fallthru
          _
        %v330 = vld [vmem:[%s294] sm:$0xff]
        %v331 = vld [vmem:[%s294 + $0x8] sm:$0xff]
        %v332 = vld [vmem:[%s294 + $0x10] sm:$0xff]
        %v333 = vld [vmem:[%s294 + $0x18] sm:$0xff]
        %v334 = vld [vmem:[%s294 + $0x20] sm:$0xff]
        %v335 = vld [vmem:[%s294 + $0x28] sm:$0xff]
        %v336 = vld [vmem:[%s294 + $0x30] sm:$0xff]
        %v337 = vld [vmem:[%s294 + $0x38] sm:$0xff]
        %v338 = vld [vmem:[%s294 + $0x40] sm:$0xff]
        %v339 = vld [vmem:[%s294 + $0x48] sm:$0xff]
        %v340 = vld [vmem:[%s294 + $0x50] sm:$0xff]
        %v341 = vld [vmem:[%s294 + $0x58] sm:$0xff]
        %v342 = vld [vmem:[%s294 + $0x60] sm:$0xff]
        %v343 = vld [vmem:[%s294 + $0x68] sm:$0xff]
        %v344 = vld [vmem:[%s294 + $0x70] sm:$0xff]
        %v345 = vld [vmem:[%s294 + $0x78] sm:$0xff]
        %v346 = vld [vmem:[%s1] sm:$0xff]
        %v347 = vld [vmem:[%s1 + $0x8] sm:$0xff]
        %v348 = vld [vmem:[%s1 + $0x10] sm:$0xff]
        %v349 = vld [vmem:[%s1 + $0x18] sm:$0xff]
        %vm350 = vcmask 261120
        %v352 = vsel %vm350, %v330, 0
        %v355 = vsel %vm350, %v331, 0
        %v358 = vsel %vm350, %v332, 0
        %v361 = vsel %vm350, %v333, 0
        %v364 = vsel %vm350, %v334, 0
        %v367 = vsel %vm350, %v335, 0
        %v370 = vsel %vm350, %v336, 0
        %v373 = vsel %vm350, %v337, 0
        %v376 = vsel %vm350, %v338, 0
        %v379 = vsel %vm350, %v339, 0
        %v382 = vsel %vm350, %v340, 0
        %v385 = vsel %vm350, %v341, 0
        %v388 = vsel %vm350, %v342, 0
        %v391 = vsel %vm350, %v343, 0
        %v394 = vsel %vm350, %v344, 0
        %v397 = vsel %vm350, %v345, 0
        %399 = vmatprep.subr.mxu0 0.0
        %400 = vmatpush1.msra.mxu0 %v346
        %401 = vmatprep.subr.mxu0 0.0
        %402 = vmatpush1.msra.mxu0 %v347
        %403 = vmatprep.subr.mxu0 0.0
        %404 = vmatpush1.msra.mxu0 %v348
        %405 = vmatprep.subr.mxu0 0.0
        %406 = vmatpush1.msra.mxu0 %v349
        %407 = vmatprep.subr.mxu0 0.0
        %408 = vmatpush1.msra.mxu0 0.0
        %409 = vmatprep.subr.mxu0 0.0
        %410 = vmatpush1.msra.mxu0 0.0
        %411 = vmatprep.subr.mxu0 0.0
        %412 = vmatpush1.msra.mxu0 0.0
        %413 = vmatprep.subr.mxu0 0.0
        %414 = vmatpush1.msra.mxu0 0.0
        %415 = vmatprep.subr.mxu0 0.0
        %416 = vmatpush1.msra.mxu0 0.0
        %417 = vmatprep.subr.mxu0 0.0
        %418 = vmatpush1.msra.mxu0 0.0
        %419 = vmatprep.subr.mxu0 0.0
        %420 = vmatpush1.msra.mxu0 0.0
        %421 = vmatprep.subr.mxu0 0.0
        %422 = vmatpush1.msra.mxu0 0.0
        %423 = vmatprep.subr.mxu0 0.0
        %424 = vmatpush1.msra.mxu0 0.0
        %425 = vmatprep.subr.mxu0 0.0
        %426 = vmatpush1.msra.mxu0 0.0
        %427 = vmatprep.subr.mxu0 0.0
        %428 = vmatpush1.msra.mxu0 0.0
        %429 = vmatprep.subr.mxu0 0.0
        %430 = vmatpush1.msra.mxu0 0.0
        %431 = vmatprep.subr.mxu0 0.0
        %432 = vmatpush1.msra.mxu0 0.0
        %433 = vmatprep.subr.mxu0 0.0
        %434 = vmatpush1.msra.mxu0 0.0
        %435 = vmatprep.subr.mxu0 0.0
        %436 = vmatpush1.msra.mxu0 0.0
        %437 = vmatprep.subr.mxu0 0.0
        %438 = vmatpush1.msra.mxu0 0.0
        %439 = vmatprep.subr.mxu0 0.0
        %440 = vmatpush1.msra.mxu0 0.0
        %441 = vmatprep.subr.mxu0 0.0
        %442 = vmatpush1.msra.mxu0 0.0
        %443 = vmatprep.subr.mxu0 0.0
        %444 = vmatpush1.msra.mxu0 0.0
        %445 = vmatprep.subr.mxu0 0.0
        %446 = vmatpush1.msra.mxu0 0.0
        %447 = vmatprep.subr.mxu0 0.0
        %448 = vmatpush1.msra.mxu0 0.0
        %449 = vmatprep.subr.mxu0 0.0
        %450 = vmatpush1.msra.mxu0 0.0
        %451 = vmatprep.subr.mxu0 0.0
        %452 = vmatpush1.msra.mxu0 0.0
        %453 = vmatprep.subr.mxu0 0.0
        %454 = vmatpush1.msra.mxu0 0.0
        %455 = vmatprep.subr.mxu0 0.0
        %456 = vmatpush1.msra.mxu0 0.0
        %457 = vmatprep.subr.mxu0 0.0
        %458 = vmatpush1.msra.mxu0 0.0
        %459 = vmatprep.subr.mxu0 0.0
        %460 = vmatpush1.msra.mxu0 0.0
        %461 = vmatprep.subr.mxu0 0.0
        %462 = vmatpush1.msra.mxu0 0.0
        %463 = vmatprep.mubr.f32.mxu0 0.0
        %464 = vmatmul.mubr.f32.gmra.mrb[0].mxu0 %v352
        %v465 = vpop.f32.mrb[0].mxu0
        %v466 = vadd.f32 0.0, %v465
        %v467 = vpop.f32.mrb[0].mxu0
        %468 = vmatprep.mubr.f32.mxu0 0.0
        %469 = vmatmul.mubr.f32.gmra.mrb[0].mxu0 %v355
        %v470 = vpop.f32.mrb[0].mxu0
        %v471 = vadd.f32 0.0, %v470
        %v472 = vpop.f32.mrb[0].mxu0
        %473 = vmatprep.mubr.f32.mxu0 0.0
        %474 = vmatmul.mubr.f32.gmra.mrb[0].mxu0 %v358
        %v475 = vpop.f32.mrb[0].mxu0
        %v476 = vadd.f32 0.0, %v475
        %v477 = vpop.f32.mrb[0].mxu0
        %478 = vmatprep.mubr.f32.mxu0 0.0
        %479 = vmatmul.mubr.f32.gmra.mrb[0].mxu0 %v361
        %v480 = vpop.f32.mrb[0].mxu0
        %v481 = vadd.f32 0.0, %v480
        %v482 = vpop.f32.mrb[0].mxu0
        %483 = vmatprep.mubr.f32.mxu0 0.0
        %484 = vmatmul.mubr.f32.gmra.mrb[0].mxu0 %v364
        %v485 = vpop.f32.mrb[0].mxu0
        %v486 = vadd.f32 0.0, %v485
        %v487 = vpop.f32.mrb[0].mxu0
        %488 = vmatprep.mubr.f32.mxu0 0.0
        %489 = vmatmul.mubr.f32.gmra.mrb[0].mxu0 %v367
        %v490 = vpop.f32.mrb[0].mxu0
        %v491 = vadd.f32 0.0, %v490
        %v492 = vpop.f32.mrb[0].mxu0
        %493 = vmatprep.mubr.f32.mxu0 0.0
        %494 = vmatmul.mubr.f32.gmra.mrb[0].mxu0 %v370
        %v495 = vpop.f32.mrb[0].mxu0
        %v496 = vadd.f32 0.0, %v495
        %v497 = vpop.f32.mrb[0].mxu0
        %498 = vmatprep.mubr.f32.mxu0 0.0
        %499 = vmatmul.mubr.f32.gmra.mrb[0].mxu0 %v373
        %v500 = vpop.f32.mrb[0].mxu0
        %v501 = vadd.f32 0.0, %v500
        %v502 = vpop.f32.mrb[0].mxu0
        %503 = vmatprep.mubr.f32.mxu0 0.0
        %504 = vmatmul.mubr.f32.gmra.mrb[0].mxu0 %v376
        %v505 = vpop.f32.mrb[0].mxu0
        %v506 = vadd.f32 0.0, %v505
        %v507 = vpop.f32.mrb[0].mxu0
        %508 = vmatprep.mubr.f32.mxu0 0.0
        %509 = vmatmul.mubr.f32.gmra.mrb[0].mxu0 %v379
        %v510 = vpop.f32.mrb[0].mxu0
        %v511 = vadd.f32 0.0, %v510
        %v512 = vpop.f32.mrb[0].mxu0
        %513 = vmatprep.mubr.f32.mxu0 0.0
        %514 = vmatmul.mubr.f32.gmra.mrb[0].mxu0 %v382
        %v515 = vpop.f32.mrb[0].mxu0
        %v516 = vadd.f32 0.0, %v515
        %v517 = vpop.f32.mrb[0].mxu0
        %518 = vmatprep.mubr.f32.mxu0 0.0
        %519 = vmatmul.mubr.f32.gmra.mrb[0].mxu0 %v385
        %v520 = vpop.f32.mrb[0].mxu0
        %v521 = vadd.f32 0.0, %v520
        %v522 = vpop.f32.mrb[0].mxu0
        %523 = vmatprep.mubr.f32.mxu0 0.0
        %524 = vmatmul.mubr.f32.gmra.mrb[0].mxu0 %v388
        %v525 = vpop.f32.mrb[0].mxu0
        %v526 = vadd.f32 0.0, %v525
        %v527 = vpop.f32.mrb[0].mxu0
        %528 = vmatprep.mubr.f32.mxu0 0.0
        %529 = vmatmul.mubr.f32.gmra.mrb[0].mxu0 %v391
        %v530 = vpop.f32.mrb[0].mxu0
        %v531 = vadd.f32 0.0, %v530
        %v532 = vpop.f32.mrb[0].mxu0
        %533 = vmatprep.mubr.f32.mxu0 0.0
        %534 = vmatmul.mubr.f32.gmra.mrb[0].mxu0 %v394
        %v535 = vpop.f32.mrb[0].mxu0
        %v536 = vadd.f32 0.0, %v535
        %v537 = vpop.f32.mrb[0].mxu0
        %538 = vmatprep.mubr.f32.mxu0 0.0
        %539 = vmatmul.mubr.f32.gmra.mrb[0].mxu0 %v397
        %v540 = vpop.f32.mrb[0].mxu0
        %v541 = vadd.f32 0.0, %v540
        %v542 = vpop.f32.mrb[0].mxu0
        %543 = vdwg.mxu0
        %v544 = vld [vmem:[#allocation2] sm:$0xff]
        %v545 = vld [vmem:[#allocation2 + $0x8] sm:$0xff]
        %v546 = vld [vmem:[#allocation2 + $0x10] sm:$0xff]
        %v547 = vld [vmem:[#allocation2 + $0x18] sm:$0xff]
        %v548 = vld [vmem:[#allocation2 + $0x20] sm:$0xff]
        %v549 = vld [vmem:[#allocation2 + $0x28] sm:$0xff]
        %v550 = vld [vmem:[#allocation2 + $0x30] sm:$0xff]
        %v551 = vld [vmem:[#allocation2 + $0x38] sm:$0xff]
        %v552 = vld [vmem:[#allocation2 + $0x40] sm:$0xff]
        %v553 = vld [vmem:[#allocation2 + $0x48] sm:$0xff]
        %v554 = vld [vmem:[#allocation2 + $0x50] sm:$0xff]
        %v555 = vld [vmem:[#allocation2 + $0x58] sm:$0xff]
        %v556 = vld [vmem:[#allocation2 + $0x60] sm:$0xff]
        %v557 = vld [vmem:[#allocation2 + $0x68] sm:$0xff]
        %v558 = vld [vmem:[#allocation2 + $0x70] sm:$0xff]
        %v559 = vld [vmem:[#allocation2 + $0x78] sm:$0xff]
        %v560 = vld [vmem:[%s307] sm:$0xff]
        %v561 = vld [vmem:[%s307 + $0x8] sm:$0xff]
        %v562 = vld [vmem:[%s307 + $0x10] sm:$0xff]
        %v563 = vld [vmem:[%s307 + $0x18] sm:$0xff]
        %v564 = vld [vmem:[%s307 + $0x20] sm:$0xff]
        %v565 = vld [vmem:[%s307 + $0x28] sm:$0xff]
        %v566 = vld [vmem:[%s307 + $0x30] sm:$0xff]
        %v567 = vld [vmem:[%s307 + $0x38] sm:$0xff]
        %v568 = vld [vmem:[%s307 + $0x40] sm:$0xff]
        %v569 = vld [vmem:[%s307 + $0x48] sm:$0xff]
        %v570 = vld [vmem:[%s307 + $0x50] sm:$0xff]
        %v571 = vld [vmem:[%s307 + $0x58] sm:$0xff]
        %v572 = vld [vmem:[%s307 + $0x60] sm:$0xff]
        %v573 = vld [vmem:[%s307 + $0x68] sm:$0xff]
        %v574 = vld [vmem:[%s307 + $0x70] sm:$0xff]
        %v575 = vld [vmem:[%s307 + $0x78] sm:$0xff]
        %576 = vmatprep.subr.mxu0 0.0
        %577 = vmatpush1.msra.mxu0 %v466
        %578 = vmatprep.subr.mxu0 0.0
        %579 = vmatpush1.msra.mxu0 %v471
        %580 = vmatprep.subr.mxu0 0.0
        %581 = vmatpush1.msra.mxu0 %v476
        %582 = vmatprep.subr.mxu0 0.0
        %583 = vmatpush1.msra.mxu0 %v481
        %584 = vmatprep.subr.mxu0 0.0
        %585 = vmatpush1.msra.mxu0 %v486
        %586 = vmatprep.subr.mxu0 0.0
        %587 = vmatpush1.msra.mxu0 %v491
        %588 = vmatprep.subr.mxu0 0.0
        %589 = vmatpush1.msra.mxu0 %v496
        %590 = vmatprep.subr.mxu0 0.0
        %591 = vmatpush1.msra.mxu0 %v501
        %592 = vmatprep.subr.mxu0 0.0
        %593 = vmatpush1.msra.mxu0 %v506
        %594 = vmatprep.subr.mxu0 0.0
        %595 = vmatpush1.msra.mxu0 %v511
        %596 = vmatprep.subr.mxu0 0.0
        %597 = vmatpush1.msra.mxu0 %v516
        %598 = vmatprep.subr.mxu0 0.0
        %599 = vmatpush1.msra.mxu0 %v521
        %600 = vmatprep.subr.mxu0 0.0
        %601 = vmatpush1.msra.mxu0 %v526
        %602 = vmatprep.subr.mxu0 0.0
        %603 = vmatpush1.msra.mxu0 %v531
        %604 = vmatprep.subr.mxu0 0.0
        %605 = vmatpush1.msra.mxu0 %v536
        %606 = vmatprep.subr.mxu0 0.0
        %607 = vmatpush1.msra.mxu0 %v541
        %608 = vmatprep.subr.mxu0 0.0
        %609 = vmatpush1.msra.mxu0 0.0
        %610 = vmatprep.subr.mxu0 0.0
        %611 = vmatpush1.msra.mxu0 0.0
        %612 = vmatprep.subr.mxu0 0.0
        %613 = vmatpush1.msra.mxu0 0.0
        %614 = vmatprep.subr.mxu0 0.0
        %615 = vmatpush1.msra.mxu0 0.0
        %616 = vmatprep.subr.mxu0 0.0
        %617 = vmatpush1.msra.mxu0 0.0
        %618 = vmatprep.subr.mxu0 0.0
        %619 = vmatpush1.msra.mxu0 0.0
        %620 = vmatprep.subr.mxu0 0.0
        %621 = vmatpush1.msra.mxu0 0.0
        %622 = vmatprep.subr.mxu0 0.0
        %623 = vmatpush1.msra.mxu0 0.0
        %624 = vmatprep.subr.mxu0 0.0
        %625 = vmatpush1.msra.mxu0 0.0
        %626 = vmatprep.subr.mxu0 0.0
        %627 = vmatpush1.msra.mxu0 0.0
        %628 = vmatprep.subr.mxu0 0.0
        %629 = vmatpush1.msra.mxu0 0.0
        %630 = vmatprep.subr.mxu0 0.0
        %631 = vmatpush1.msra.mxu0 0.0
        %632 = vmatprep.subr.mxu0 0.0
        %633 = vmatpush1.msra.mxu0 0.0
        %634 = vmatprep.subr.mxu0 0.0
        %635 = vmatpush1.msra.mxu0 0.0
        %636 = vmatprep.subr.mxu0 0.0
        %637 = vmatpush1.msra.mxu0 0.0
        %638 = vmatprep.subr.mxu0 0.0
        %639 = vmatpush1.msra.mxu0 0.0
        %640 = vmatprep.mubr.f32.mxu0 0.0
        %641 = vmatmul.mubr.f32.gmra.mrb[0].mxu0 %v560
        %v642 = vpop.f32.mrb[0].mxu0
        %v643 = vadd.f32 0.0, %v642
        %v644 = vpop.f32.mrb[0].mxu0
        %645 = vmatprep.mubr.f32.mxu0 0.0
        %646 = vmatmul.mubr.f32.gmra.mrb[0].mxu0 %v561
        %v647 = vpop.f32.mrb[0].mxu0
        %v648 = vadd.f32 0.0, %v647
        %v649 = vpop.f32.mrb[0].mxu0
        %650 = vmatprep.mubr.f32.mxu0 0.0
        %651 = vmatmul.mubr.f32.gmra.mrb[0].mxu0 %v562
        %v652 = vpop.f32.mrb[0].mxu0
        %v653 = vadd.f32 0.0, %v652
        %v654 = vpop.f32.mrb[0].mxu0
        %655 = vmatprep.mubr.f32.mxu0 0.0
        %656 = vmatmul.mubr.f32.gmra.mrb[0].mxu0 %v563
        %v657 = vpop.f32.mrb[0].mxu0
        %v658 = vadd.f32 0.0, %v657
        %v659 = vpop.f32.mrb[0].mxu0
        %660 = vmatprep.mubr.f32.mxu0 0.0
        %661 = vmatmul.mubr.f32.gmra.mrb[0].mxu0 %v564
        %v662 = vpop.f32.mrb[0].mxu0
        %v663 = vadd.f32 0.0, %v662
        %v664 = vpop.f32.mrb[0].mxu0
        %665 = vmatprep.mubr.f32.mxu0 0.0
        %666 = vmatmul.mubr.f32.gmra.mrb[0].mxu0 %v565
        %v667 = vpop.f32.mrb[0].mxu0
        %v668 = vadd.f32 0.0, %v667
        %v669 = vpop.f32.mrb[0].mxu0
        %670 = vmatprep.mubr.f32.mxu0 0.0
        %671 = vmatmul.mubr.f32.gmra.mrb[0].mxu0 %v566
        %v672 = vpop.f32.mrb[0].mxu0
        %v673 = vadd.f32 0.0, %v672
        %v674 = vpop.f32.mrb[0].mxu0
        %675 = vmatprep.mubr.f32.mxu0 0.0
        %676 = vmatmul.mubr.f32.gmra.mrb[0].mxu0 %v567
        %v677 = vpop.f32.mrb[0].mxu0
        %v678 = vadd.f32 0.0, %v677
        %v679 = vpop.f32.mrb[0].mxu0
        %680 = vmatprep.mubr.f32.mxu0 0.0
        %681 = vmatmul.mubr.f32.gmra.mrb[0].mxu0 %v568
        %v682 = vpop.f32.mrb[0].mxu0
        %v683 = vadd.f32 0.0, %v682
        %v684 = vpop.f32.mrb[0].mxu0
        %685 = vmatprep.mubr.f32.mxu0 0.0
        %686 = vmatmul.mubr.f32.gmra.mrb[0].mxu0 %v569
        %v687 = vpop.f32.mrb[0].mxu0
        %v688 = vadd.f32 0.0, %v687
        %v689 = vpop.f32.mrb[0].mxu0
        %690 = vmatprep.mubr.f32.mxu0 0.0
        %691 = vmatmul.mubr.f32.gmra.mrb[0].mxu0 %v570
        %v692 = vpop.f32.mrb[0].mxu0
        %v693 = vadd.f32 0.0, %v692
        %v694 = vpop.f32.mrb[0].mxu0
        %695 = vmatprep.mubr.f32.mxu0 0.0
        %696 = vmatmul.mubr.f32.gmra.mrb[0].mxu0 %v571
        %v697 = vpop.f32.mrb[0].mxu0
        %v698 = vadd.f32 0.0, %v697
        %v699 = vpop.f32.mrb[0].mxu0
        %700 = vmatprep.mubr.f32.mxu0 0.0
        %701 = vmatmul.mubr.f32.gmra.mrb[0].mxu0 %v572
        %v702 = vpop.f32.mrb[0].mxu0
        %v703 = vadd.f32 0.0, %v702
        %v704 = vpop.f32.mrb[0].mxu0
        %705 = vmatprep.mubr.f32.mxu0 0.0
        %706 = vmatmul.mubr.f32.gmra.mrb[0].mxu0 %v573
        %v707 = vpop.f32.mrb[0].mxu0
        %v708 = vadd.f32 0.0, %v707
        %v709 = vpop.f32.mrb[0].mxu0
        %710 = vmatprep.mubr.f32.mxu0 0.0
        %711 = vmatmul.mubr.f32.gmra.mrb[0].mxu0 %v574
        %v712 = vpop.f32.mrb[0].mxu0
        %v713 = vadd.f32 0.0, %v712
        %v714 = vpop.f32.mrb[0].mxu0
        %715 = vmatprep.mubr.f32.mxu0 0.0
        %716 = vmatmul.mubr.f32.gmra.mrb[0].mxu0 %v575
        %v717 = vpop.f32.mrb[0].mxu0
        %v718 = vadd.f32 0.0, %v717
        %v719 = vpop.f32.mrb[0].mxu0
        %720 = vdwg.mxu0
        %v721 = vadd.f32 %v544, %v643
        %v722 = vadd.f32 %v545, %v648
        %v723 = vadd.f32 %v546, %v653
        %v724 = vadd.f32 %v547, %v658
        %v725 = vadd.f32 %v548, %v663
        %v726 = vadd.f32 %v549, %v668
        %v727 = vadd.f32 %v550, %v673
        %v728 = vadd.f32 %v551, %v678
        %v729 = vadd.f32 %v552, %v683
        %v730 = vadd.f32 %v553, %v688
        %v731 = vadd.f32 %v554, %v693
        %v732 = vadd.f32 %v555, %v698
        %v733 = vadd.f32 %v556, %v703
        %v734 = vadd.f32 %v557, %v708
        %v735 = vadd.f32 %v558, %v713
        %v736 = vadd.f32 %v559, %v718
        %737 = vst [vmem:[#allocation2] sm:$0xff] %v721
        %738 = vst [vmem:[#allocation2 + $0x8] sm:$0xff] %v722
        %739 = vst [vmem:[#allocation2 + $0x10] sm:$0xff] %v723
        %740 = vst [vmem:[#allocation2 + $0x18] sm:$0xff] %v724
        %741 = vst [vmem:[#allocation2 + $0x20] sm:$0xff] %v725
        %742 = vst [vmem:[#allocation2 + $0x28] sm:$0xff] %v726
        %743 = vst [vmem:[#allocation2 + $0x30] sm:$0xff] %v727
        %744 = vst [vmem:[#allocation2 + $0x38] sm:$0xff] %v728
        %745 = vst [vmem:[#allocation2 + $0x40] sm:$0xff] %v729
        %746 = vst [vmem:[#allocation2 + $0x48] sm:$0xff] %v730
        %747 = vst [vmem:[#allocation2 + $0x50] sm:$0xff] %v731
        %748 = vst [vmem:[#allocation2 + $0x58] sm:$0xff] %v732
        %749 = vst [vmem:[#allocation2 + $0x60] sm:$0xff] %v733
        %750 = vst [vmem:[#allocation2 + $0x68] sm:$0xff] %v734
        %751 = vst [vmem:[#allocation2 + $0x70] sm:$0xff] %v735
        %752 = vst [vmem:[#allocation2 + $0x78] sm:$0xff] %v736
        // Predicated region
        $region45: #{gcn_forward.1} parent=39 // pred_check
          %p753 = pneg %p310
        $region46: #{gcn_forward.1} parent=39 // pred_check_branch
          %755 = sbr.rel (%p753) target = $region48
        $region47: #{gcn_forward.1} parent=39 // pred_region
          %v756 = vld [vmem:[#allocation2] sm:$0xff]
          %v757 = vld [vmem:[#allocation2 + $0x8] sm:$0xff]
          %v758 = vld [vmem:[#allocation2 + $0x10] sm:$0xff]
          %v759 = vld [vmem:[#allocation2 + $0x18] sm:$0xff]
          %v760 = vld [vmem:[#allocation2 + $0x20] sm:$0xff]
          %v761 = vld [vmem:[#allocation2 + $0x28] sm:$0xff]
          %v762 = vld [vmem:[#allocation2 + $0x30] sm:$0xff]
          %v763 = vld [vmem:[#allocation2 + $0x38] sm:$0xff]
          %v764 = vld [vmem:[#allocation2 + $0x40] sm:$0xff]
          %v765 = vld [vmem:[#allocation2 + $0x48] sm:$0xff]
          %v766 = vld [vmem:[#allocation2 + $0x50] sm:$0xff]
          %v767 = vld [vmem:[#allocation2 + $0x58] sm:$0xff]
          %v768 = vld [vmem:[#allocation2 + $0x60] sm:$0xff]
          %v769 = vld [vmem:[#allocation2 + $0x68] sm:$0xff]
          %v770 = vld [vmem:[#allocation2 + $0x70] sm:$0xff]
          %v771 = vld [vmem:[#allocation2 + $0x78] sm:$0xff]
          %v772 = vld [vmem:[%s3] sm:$0x1]
          %v774 = vlaneseq
          %v775 = vshrl.u32 %v774, 7
          %v776 = vsub.s32 0, %v775
          %v777 = vrot.slane %v772, %v776
          %v779 = vadd.f32 %v756, %v777
          %v780 = vadd.f32 %v757, %v777
          %v781 = vadd.f32 %v758, %v777
          %v782 = vadd.f32 %v759, %v777
          %v783 = vadd.f32 %v760, %v777
          %v784 = vadd.f32 %v761, %v777
          %v785 = vadd.f32 %v762, %v777
          %v786 = vadd.f32 %v763, %v777
          %v787 = vadd.f32 %v764, %v777
          %v788 = vadd.f32 %v765, %v777
          %v789 = vadd.f32 %v766, %v777
          %v790 = vadd.f32 %v767, %v777
          %v791 = vadd.f32 %v768, %v777
          %v792 = vadd.f32 %v769, %v777
          %v793 = vadd.f32 %v770, %v777
          %v794 = vadd.f32 %v771, %v777
          %vm795 = vcmp.gt.f32.partialorder %v779, 0.0
          %vm796 = vcmp.gt.f32.partialorder %v780, 0.0
          %vm797 = vcmp.gt.f32.partialorder %v781, 0.0
          %vm798 = vcmp.gt.f32.partialorder %v782, 0.0
          %vm799 = vcmp.gt.f32.partialorder %v783, 0.0
          %vm800 = vcmp.gt.f32.partialorder %v784, 0.0
          %vm801 = vcmp.gt.f32.partialorder %v785, 0.0
          %vm802 = vcmp.gt.f32.partialorder %v786, 0.0
          %vm803 = vcmp.gt.f32.partialorder %v787, 0.0
          %vm804 = vcmp.gt.f32.partialorder %v788, 0.0
          %vm805 = vcmp.gt.f32.partialorder %v789, 0.0
          %vm806 = vcmp.gt.f32.partialorder %v790, 0.0
          %vm807 = vcmp.gt.f32.partialorder %v791, 0.0
          %vm808 = vcmp.gt.f32.partialorder %v792, 0.0
          %vm809 = vcmp.gt.f32.partialorder %v793, 0.0
          %vm810 = vcmp.gt.f32.partialorder %v794, 0.0
          %v811 = vld [vmem:[#allocation3] sm:$0x1]
          %v813 = vlaneseq
          %v814 = vshrl.u32 %v813, 7
          %v815 = vsub.s32 0, %v814
          %v816 = vrot.slane %v811, %v815
          %817 = vset.pattern.permute.xlu0 0
          %818 = vperm.xlu0 %817, %v816
          %v819 = vpop.permute.xlu0 %818
          %v821 = vmul.f32 %v819, %v779
          %v822 = vmul.f32 %v819, %v780
          %v823 = vmul.f32 %v819, %v781
          %v824 = vmul.f32 %v819, %v782
          %v825 = vmul.f32 %v819, %v783
          %v826 = vmul.f32 %v819, %v784
          %v827 = vmul.f32 %v819, %v785
          %v828 = vmul.f32 %v819, %v786
          %v829 = vmul.f32 %v819, %v787
          %v830 = vmul.f32 %v819, %v788
          %v831 = vmul.f32 %v819, %v789
          %v832 = vmul.f32 %v819, %v790
          %v833 = vmul.f32 %v819, %v791
          %v834 = vmul.f32 %v819, %v792
          %v835 = vmul.f32 %v819, %v793
          %v836 = vmul.f32 %v819, %v794
          %v837 = vsel %vm795, %v779, %v821
          %v838 = vsel %vm796, %v780, %v822
          %v839 = vsel %vm797, %v781, %v823
          %v840 = vsel %vm798, %v782, %v824
          %v841 = vsel %vm799, %v783, %v825
          %v842 = vsel %vm800, %v784, %v826
          %v843 = vsel %vm801, %v785, %v827
          %v844 = vsel %vm802, %v786, %v828
          %v845 = vsel %vm803, %v787, %v829
          %v846 = vsel %vm804, %v788, %v830
          %v847 = vsel %vm805, %v789, %v831
          %v848 = vsel %vm806, %v790, %v832
          %v849 = vsel %vm807, %v791, %v833
          %v850 = vsel %vm808, %v792, %v834
          %v851 = vsel %vm809, %v793, %v835
          %v852 = vsel %vm810, %v794, %v836
          %853 = vst [vmem:[%s285] sm:$0xff] %v837
          %854 = vst [vmem:[%s285 + $0x8] sm:$0xff] %v838
          %855 = vst [vmem:[%s285 + $0x10] sm:$0xff] %v839
          %856 = vst [vmem:[%s285 + $0x18] sm:$0xff] %v840
          %857 = vst [vmem:[%s285 + $0x20] sm:$0xff] %v841
          %858 = vst [vmem:[%s285 + $0x28] sm:$0xff] %v842
          %859 = vst [vmem:[%s285 + $0x30] sm:$0xff] %v843
          %860 = vst [vmem:[%s285 + $0x38] sm:$0xff] %v844
          %861 = vst [vmem:[%s285 + $0x40] sm:$0xff] %v845
          %862 = vst [vmem:[%s285 + $0x48] sm:$0xff] %v846
          %863 = vst [vmem:[%s285 + $0x50] sm:$0xff] %v847
          %864 = vst [vmem:[%s285 + $0x58] sm:$0xff] %v848
          %865 = vst [vmem:[%s285 + $0x60] sm:$0xff] %v849
          %866 = vst [vmem:[%s285 + $0x68] sm:$0xff] %v850
          %867 = vst [vmem:[%s285 + $0x70] sm:$0xff] %v851
          %868 = vst [vmem:[%s285 + $0x78] sm:$0xff] %v852
        $region48: #{gcn_forward.1} parent=39 // pred_fallthru
          _
        %s869 = sand.u32 %s171, 1
        %s870 = scalar_lea.sflag [#allocation5], %s869
        %s871 = sand.u32 %s171, 1
        %s872 = smul.addr %s871, 128
        %s873 = scalar_lea.vmem [#allocation4], %s872
        // Predicated region
        $region49: #{gcn_forward.1} parent=39 // pred_check
          %p874 = pneg %p181
        $region50: #{gcn_forward.1} parent=39 // pred_check_branch
          %876 = sbr.rel (%p874) target = $region52
        $region51: #{gcn_forward.1} parent=39 // pred_region
          %s877 = smul.u32 16, %s27
          %s879 = ssub.s32 2048, 2048
          %880 = vsyncadd %s870, %s879
          %s881 = smul.addr %s26, 16
          %s882 = sadd.s32 %s877, %s881
          %s883 = smul.addr %s882, 128
          %s884 = scalar_lea.hbm %s5, %s883
          %s885 = sshll.u32 %s873, 4
          %s886 = int_to_ptr.vmem [resolvable:$true] %s885
          %891 = dma.vmem_to_hbm [thread:$0]  %s886, 2048, %s884, %s870, 128, 128, 8
        $region52: #{gcn_forward.1} parent=39 // pred_fallthru
          _
      $region40: #{gcn_forward.1} parent=5 // pred_fallthru
        _
      %p892 = scmp.le.s32.totalorder 2, %s16
      // Predicated region
      $region53: #{gcn_forward.1} parent=5 // pred_check
        %p893 = pneg %p892
      $region54: #{gcn_forward.1} parent=5 // pred_check_branch
        %895 = sbr.rel (%p893) target = $region56
      $region55: #{gcn_forward.1} parent=5 // pred_region
        %s896 = ssub.s32 %s16, 2
        // Predicated region
        $region57: #{gcn_forward.1} parent=55 // pred_check
          %p897 = pneg %p187
        $region58: #{gcn_forward.1} parent=55 // pred_check_branch
          %899 = sbr.rel (%p897) target = $region60
        $region59: #{gcn_forward.1} parent=55 // pred_region
          %s900 = sand.u32 %s172, 1
          %s901 = scalar_lea.sflag [#allocation5], %s900
          %s902 = sand.u32 %s172, 1
          %s903 = smul.addr %s902, 128
          %s904 = scalar_lea.vmem [#allocation4], %s903
          %905 = dma.done %s901, 2048
        $region60: #{gcn_forward.1} parent=55 // pred_fallthru
          _
      $region56: #{gcn_forward.1} parent=5 // pred_fallthru
        _
    $region6: #{gcn_forward.1} parent=1 // loop_footer
      %s20 = sadd.s32 1, %s16
    $region7: #{gcn_forward.1} parent=1 // loop_footer_branch
      %15 = sbr.rel target = $region3
    $region8: #{gcn_forward.1} parent=1 // loop_exit
      _
    %906 = vsyncpa [#allocation5], 1
    %s907 = scalar_lea.sflag [#allocation5], 1
    %908 = vsyncpa %s907, 1

</llo_original>
